<compile_context>
chip_gen: v7x
topology: tpu7x:2x2x1
jax: 0.10.0
libtpu: 0.0.40
codegen_flags: <defaults>
</compile_context>

<pallas_src>
import math
from functools import partial

import jax
import jax.numpy as jnp
from jax import lax
from jax.experimental import pallas as pl
from jax.experimental.pallas import tpu as pltpu


# ------------------------ generation-aware tuning knobs ---------------------- #

def _vmem_capacity_bytes():
    try:
        return int(pltpu.get_tpu_info().vmem_capacity_bytes)
    except Exception:
        return 64 * 1024 * 1024          # conservative fallback (v7x-sized)


_VMEM_CAP = _vmem_capacity_bytes()
_BIG_VMEM = _VMEM_CAP >= 100 * 1024 * 1024          # v5e / v6e (128 MiB per TC)
_VMEM_LIMIT = (96 * 1024 * 1024) if _BIG_VMEM else min(
    36 * 1024 * 1024, int(0.6 * _VMEM_CAP))          # v7x: stay well under 64 MiB
_TM_PROJ = 512 if _BIG_VMEM else 256                 # row tile for projections
_TM_FFN = 512 if _BIG_VMEM else 192                  # row tile for the FFN kernel
_TH_FFN = 512 if _BIG_VMEM else 256                  # hidden tile for the FFN kernel

_LANE = (128,)                        # alignments allowed for last (lane) dims
_SUB = (128, 8)                       # alignments allowed for second-to-last dims


def _pick_tile(dim, desired, aligns=_SUB):
    """Largest block <= desired that equals `dim` or is an aligned divisor."""
    if dim <= desired:
        return dim
    for a in aligns:
        t = (desired // a) * a
        while t >= a:
            if dim % t == 0:
                return t
            t -= a
    # Fallback: full dimension (only safe for modest dims, e.g. odd vocab sizes).
    return dim


# --------------------------- tiled matmul (+residual) ------------------------ #

def _matmul_kernel(x_ref, w_ref, o_ref, acc_ref):
    @pl.when(pl.program_id(2) == 0)
    def _():
        acc_ref[...] = jnp.zeros_like(acc_ref)

    acc_ref[...] += jnp.dot(x_ref[...], w_ref[...],
                            preferred_element_type=jnp.float32)

    @pl.when(pl.program_id(2) == pl.num_programs(2) - 1)
    def _():
        o_ref[...] = acc_ref[...].astype(o_ref.dtype)


def _matmul_res_kernel(x_ref, w_ref, r_ref, o_ref, acc_ref):
    @pl.when(pl.program_id(2) == 0)
    def _():
        acc_ref[...] = jnp.zeros_like(acc_ref)

    acc_ref[...] += jnp.dot(x_ref[...], w_ref[...],
                            preferred_element_type=jnp.float32)

    @pl.when(pl.program_id(2) == pl.num_programs(2) - 1)
    def _():
        # Fused residual add in the epilogue (saves a separate XLA add pass).
        o_ref[...] = (r_ref[...].astype(jnp.float32)
                      + acc_ref[...]).astype(o_ref.dtype)


def matmul(x, w, residual=None, *, tm=None, tn=512, tk=512, out_dtype=jnp.float32):
    M, K = x.shape
    N = w.shape[1]
    tm = _pick_tile(M, _TM_PROJ if tm is None else tm, _SUB)
    tn = _pick_tile(N, tn, _LANE)
    tk = _pick_tile(K, tk, _LANE)
    grid = (M // tm, N // tn, K // tk)

    in_specs = [pl.BlockSpec((tm, tk), lambda i, j, k: (i, k)),
                pl.BlockSpec((tk, tn), lambda i, j, k: (k, j))]
    args = (x, w)
    kern = _matmul_kernel
    if residual is not None:
        in_specs.append(pl.BlockSpec((tm, tn), lambda i, j, k: (i, j)))
        args = (x, w, residual)
        kern = _matmul_res_kernel

    return pl.pallas_call(
        kern,
        grid=grid,
        in_specs=in_specs,
        out_specs=pl.BlockSpec((tm, tn), lambda i, j, k: (i, j)),
        out_shape=jax.ShapeDtypeStruct((M, N), out_dtype),
        scratch_shapes=[pltpu.VMEM((tm, tn), jnp.float32)],
        compiler_params=pltpu.CompilerParams(
            dimension_semantics=("parallel", "parallel", "arbitrary"),
            vmem_limit_bytes=_VMEM_LIMIT),
        cost_estimate=pl.CostEstimate(
            flops=2 * M * N * K, transcendentals=0,
            bytes_accessed=int(M * K * x.dtype.itemsize
                               + K * N * w.dtype.itemsize
                               + M * N * jnp.dtype(out_dtype).itemsize)),
    )(*args)


# ----------------------- fused RMSNorm + projection -------------------------- #

def _norm_matmul_kernel(eps, x_ref, g_ref, w_ref, o_ref, xn_sc):
    # RMSNorm hoisted: computed once per row tile (j == 0) into bf16 scratch,
    # reused by every output-column tile j (pure MXU matmul per step).
    @pl.when(pl.program_id(1) == 0)
    def _():
        x = x_ref[...].astype(jnp.float32)
        ms = jnp.mean(x * x, axis=-1, keepdims=True)
        xn_sc[...] = (x * lax.rsqrt(ms + eps) * g_ref[...]).astype(xn_sc.dtype)

    o_ref[...] = jnp.dot(xn_sc[...], w_ref[...],
                         preferred_element_type=jnp.float32).astype(o_ref.dtype)


def norm_matmul(x, g, w, eps, *, tm=None, tn=512, out_dtype=jnp.float32):
    """out = RMSNorm(x; g, eps) @ w.  Row (D) axis kept whole for the norm."""
    M, D = x.shape
    N = w.shape[1]
    tm = _pick_tile(M, _TM_PROJ if tm is None else tm, _SUB)
    tn = _pick_tile(N, tn, _LANE)
    grid = (M // tm, N // tn)
    return pl.pallas_call(
        partial(_norm_matmul_kernel, eps),
        grid=grid,
        in_specs=[pl.BlockSpec((tm, D), lambda i, j: (i, 0)),
                  pl.BlockSpec((1, D), lambda i, j: (0, 0)),
                  pl.BlockSpec((D, tn), lambda i, j: (0, j))],
        out_specs=pl.BlockSpec((tm, tn), lambda i, j: (i, j)),
        out_shape=jax.ShapeDtypeStruct((M, N), out_dtype),
        scratch_shapes=[pltpu.VMEM((tm, D), jnp.bfloat16)],
        compiler_params=pltpu.CompilerParams(
            dimension_semantics=("parallel", "arbitrary"),
            vmem_limit_bytes=_VMEM_LIMIT),
        cost_estimate=pl.CostEstimate(
            flops=2 * M * N * D + 6 * M * D, transcendentals=M,
            bytes_accessed=int(M * D * x.dtype.itemsize
                               + D * N * w.dtype.itemsize
                               + M * N * jnp.dtype(out_dtype).itemsize)),
    )(x, g.reshape(1, D), w)


# ------------- fused RMSNorm + SwiGLU feed-forward (+residual) --------------- #

def _norm_ffn_kernel(eps, x_ref, g_ref, w1_ref, w3_ref, w2_ref, o_ref,
                     xn_sc, acc_sc):
    j = pl.program_id(1)

    @pl.when(j == 0)
    def _():
        x = x_ref[...].astype(jnp.float32)
        ms = jnp.mean(x * x, axis=-1, keepdims=True)
        xn_sc[...] = (x * lax.rsqrt(ms + eps) * g_ref[...]).astype(xn_sc.dtype)
        acc_sc[...] = jnp.zeros_like(acc_sc)

    xn = xn_sc[...]
    h1 = jnp.dot(xn, w1_ref[...], preferred_element_type=jnp.float32)
    h3 = jnp.dot(xn, w3_ref[...], preferred_element_type=jnp.float32)
    gate = (jax.nn.silu(h1) * h3).astype(w2_ref.dtype)      # f32 elementwise math
    acc_sc[...] += jnp.dot(gate, w2_ref[...], preferred_element_type=jnp.float32)

    @pl.when(j == pl.num_programs(1) - 1)
    def _():
        # Fused residual: out = x + FFN(RMSNorm(x)).
        o_ref[...] = (x_ref[...].astype(jnp.float32) + acc_sc[...]).astype(o_ref.dtype)


def norm_ffn(x, g, w1, w3, w2, eps, *, tm=None, th=None):
    M, D = x.shape
    Hd = w1.shape[1]
    tm = _pick_tile(M, _TM_FFN if tm is None else tm, _SUB)
    th = _pick_tile(Hd, _TH_FFN if th is None else th, _LANE)
    grid = (M // tm, Hd // th)
    return pl.pallas_call(
        partial(_norm_ffn_kernel, eps),
        grid=grid,
        in_specs=[pl.BlockSpec((tm, D), lambda i, j: (i, 0)),
                  pl.BlockSpec((1, D), lambda i, j: (0, 0)),
                  pl.BlockSpec((D, th), lambda i, j: (0, j)),
                  pl.BlockSpec((D, th), lambda i, j: (0, j)),
                  pl.BlockSpec((th, D), lambda i, j: (j, 0))],
        out_specs=pl.BlockSpec((tm, D), lambda i, j: (i, 0)),
        out_shape=jax.ShapeDtypeStruct((M, D), jnp.float32),
        scratch_shapes=[pltpu.VMEM((tm, D), jnp.bfloat16),
                        pltpu.VMEM((tm, D), jnp.float32)],
        compiler_params=pltpu.CompilerParams(
            dimension_semantics=("parallel", "arbitrary"),
            vmem_limit_bytes=_VMEM_LIMIT),
        cost_estimate=pl.CostEstimate(
            flops=6 * M * Hd * D, transcendentals=M * Hd,
            bytes_accessed=int(2 * M * D * 4 + 3 * D * Hd * 2)),
    )(x, g.reshape(1, D), w1, w3, w2)


# ----------------- flash attention (GQA, causal, block-sparse) --------------- #

def _flash_attn_kernel(start_pos, tq, tkv, n_rep, hd, nkv, ns,
                       qi_tab, ki_tab, q_ref, k_ref, v_ref, o_ref,
                       m_sc, l_sc, acc_sc):
    t = pl.program_id(2)
    qi = qi_tab[t]
    ki = ki_tab[t]
    # Last live kv block index for this q tile (causal horizon), scalar math.
    last_ki = jnp.minimum(nkv - 1, (start_pos + (qi + 1) * tq - 1) // tkv)

    @pl.when(ki == 0)
    def _():
        m_sc[...] = jnp.full_like(m_sc, -jnp.inf)
        l_sc[...] = jnp.zeros_like(l_sc)
        acc_sc[...] = jnp.zeros_like(acc_sc)

    def bc(stat, width):
        # Broadcast per-row stats (tq, ns) against a (tq, width) block.
        if ns == 1 or width == ns:
            return stat
        return jnp.tile(stat, (1, width // ns))

    k = k_ref[0]                         # (tkv, hd) bf16
    v = v_ref[0]                         # (tkv, hd) bf16

    # Causal mask from one thin row iota + one lane iota; scalars folded into
    # the thin side so the only full-size ops are a compare and a select/rep.
    kv_iota = lax.broadcasted_iota(jnp.int32, (tq, tkv), 1)
    q_rel = (start_pos + qi * tq - ki * tkv
             + lax.broadcasted_iota(jnp.int32, (tq, 1), 0))
    keep = kv_iota <= q_rel              # (tq, tkv)

    for r in range(n_rep):               # static unroll over the grouped q heads
        q_r = q_ref[0, :, r * hd:(r + 1) * hd]            # (tq, hd) bf16, prescaled
        s = lax.dot_general(q_r, k, (((1,), (1,)), ((), ())),
                            preferred_element_type=jnp.float32)   # (tq, tkv)
        s = jnp.where(keep, s, -jnp.inf)

        m_prev = m_sc[r]
        m_next = jnp.maximum(m_prev, s.max(axis=-1, keepdims=True))
        alpha = jnp.exp(m_prev - m_next)
        p = jnp.exp(s - bc(m_next, tkv))
        l_sc[r] = alpha * l_sc[r] + p.sum(axis=-1, keepdims=True)
        pv = jnp.dot(p.astype(v.dtype), v, preferred_element_type=jnp.float32)
        acc_sc[r] = bc(alpha, hd) * acc_sc[r] + pv
        m_sc[r] = m_next

    @pl.when(ki == last_ki)
    def _():
        for r in range(n_rep):
            inv = pl.reciprocal(l_sc[r], approx=True)
            o_ref[0, :, r * hd:(r + 1) * hd] = (
                acc_sc[r] * bc(inv, hd)).astype(o_ref.dtype)


def _causal_block_table(S, Skv, start_pos, tq, tkv):
    """Flattened (q_tile, kv_tile) pairs for live (non fully-masked) blocks."""
    nq, nkv = S // tq, Skv // tkv
    qi_list, ki_list = [], []
    for q in range(nq):
        q_last = start_pos + (q + 1) * tq - 1
        live = min(nkv, q_last // tkv + 1)
        for kk in range(live):
            qi_list.append(q)
            ki_list.append(kk)
    return (jnp.asarray(qi_list, dtype=jnp.int32),
            jnp.asarray(ki_list, dtype=jnp.int32))


def flash_attention(q, k, v, start_pos, n_kv_heads, head_dim, *, tq=256, tkv=512):
    """Causal GQA flash attention.

    q:     (B, S, H*hd)    bf16, heads grouped so head h uses kv head h // n_rep,
                            already scaled by 1/sqrt(hd) (folded into RoPE).
    k, v:  (B, Skv, Hkv*hd) bf16 (zero-filled for the fresh-cache prefix).
    Returns (B, S, H*hd) bf16 in the same head-major-on-lanes layout.
    """
    B, S, QD = q.shape
    Skv = k.shape[1]
    Hkv, hd = n_kv_heads, head_dim
    n_rep = QD // (Hkv * hd)
    tq = _pick_tile(S, tq, _SUB)
    tkv = _pick_tile(Skv, tkv, _SUB)
    nkv = Skv // tkv
    qi_tab, ki_tab = _causal_block_table(S, Skv, start_pos, tq, tkv)
    T = int(qi_tab.shape[0])
    # Lane-replicated softmax stats on the big-model path (tkv, hd mult. of 128).
    ns = 128 if (tkv % 128 == 0 and hd % 128 == 0) else 1

    kernel = partial(_flash_attn_kernel, start_pos, tq, tkv, n_rep, hd, nkv, ns)
    grid = (B, Hkv, T)
    return pl.pallas_call(
        kernel,
        grid_spec=pltpu.PrefetchScalarGridSpec(
            num_scalar_prefetch=2,
            grid=grid,
            in_specs=[
                pl.BlockSpec((1, tq, n_rep * hd),
                             lambda b, g, t, qt, kt: (b, qt[t], g)),
                pl.BlockSpec((1, tkv, hd),
                             lambda b, g, t, qt, kt: (b, kt[t], g)),
                pl.BlockSpec((1, tkv, hd),
                             lambda b, g, t, qt, kt: (b, kt[t], g)),
            ],
            out_specs=pl.BlockSpec((1, tq, n_rep * hd),
                                   lambda b, g, t, qt, kt: (b, qt[t], g)),
            scratch_shapes=[pltpu.VMEM((n_rep, tq, ns), jnp.float32),
                            pltpu.VMEM((n_rep, tq, ns), jnp.float32),
                            pltpu.VMEM((n_rep, tq, hd), jnp.float32)],
        ),
        out_shape=jax.ShapeDtypeStruct((B, S, QD), jnp.bfloat16),
        compiler_params=pltpu.CompilerParams(
            dimension_semantics=("parallel", "parallel", "arbitrary"),
            vmem_limit_bytes=_VMEM_LIMIT),
        cost_estimate=pl.CostEstimate(
            flops=4 * B * Hkv * n_rep * T * tq * tkv * hd,
            transcendentals=B * Hkv * n_rep * T * tq * tkv,
            bytes_accessed=int(4 * q.size                         # q + out, bf16
                               + 4 * B * Hkv * T * tkv * hd * 2)),  # k + v reads
    )(qi_tab, ki_tab, q, k, v)


# --------------------------------- JAX glue ---------------------------------- #

def precompute_rope(head_dim, end, theta):
    freqs = 1.0 / (theta ** (jnp.arange(0, head_dim, 2, dtype=jnp.float32) / head_dim))
    t = jnp.arange(end, dtype=jnp.float32)
    angles = jnp.outer(t, freqs)               # (end, head_dim//2)
    return jnp.cos(angles), jnp.sin(angles)


def apply_rope(x, cos, sin):
    # x: (B, S, H, hd); consecutive element pairs along hd are (re, im).
    B, S, H, hd = x.shape
    xr = x.astype(jnp.float32).reshape(B, S, H, hd // 2, 2)
    xe, xo = xr[..., 0], xr[..., 1]
    c = cos[None, :, None, :]
    s = sin[None, :, None, :]
    oe = xe * c - xo * s
    oo = xe * s + xo * c
    return jnp.stack([oe, oo], axis=-1).reshape(B, S, H, hd).astype(x.dtype)


def transformer_block(lp, cfg, x, start_pos, cos, sin):
    B, S, D = x.shape
    H = cfg["n_heads"]
    Hkv = cfg["n_kv_heads"]
    hd = D // H
    eps = cfg["norm_eps"]
    scale = 1.0 / math.sqrt(hd)

    xf = x.reshape(B * S, D)

    # Fused attention_norm + (wq|wk|wv) projection (RMSNorm hoisted in-kernel).
    qkv = norm_matmul(xf, lp["attn_norm_w"], lp["wqkv"], eps,
                      out_dtype=jnp.bfloat16)              # (B*S, (H+2Hkv)*hd)
    q_end = H * hd
    k_end = q_end + Hkv * hd
    xq = qkv[:, :q_end].reshape(B, S, H, hd)
    xk = qkv[:, q_end:k_end].reshape(B, S, Hkv, hd)
    xv = qkv[:, k_end:].reshape(B, S, Hkv * hd)

    # RoPE; 1/sqrt(hd) score scale folded into q's rotation tables (free).
    xq = apply_rope(xq, cos * scale, sin * scale).reshape(B, S, H * hd)
    xk = apply_rope(xk, cos, sin).reshape(B, S, Hkv * hd)

    # Fresh KV-cache semantics: positions [0, start_pos) hold zeros, matching the
    # torch module on its first call with a newly created (zero) cache.
    # TODO(synk): with a persisted cache these slots would hold real K/V instead.
    if start_pos > 0:
        zpad = jnp.zeros((B, start_pos, Hkv * hd), xk.dtype)
        keys = jnp.concatenate([zpad, xk], axis=1)
        values = jnp.concatenate([zpad, xv], axis=1)
    else:
        keys, values = xk, xv

    # Attention in the natural token-major / heads-on-lanes layout: no transposes.
    attn = flash_attention(xq, keys, values, start_pos, Hkv, hd)   # (B, S, H*hd)
    attn = attn.reshape(B * S, D)

    # wo projection with the attention residual fused into the epilogue.
    h = matmul(attn, lp["wo"], residual=xf)                        # (B*S, D) f32
    # ffn_norm + SwiGLU FFN + residual, all in one kernel.
    out = norm_ffn(h, lp["ffn_norm_w"], lp["w1"], lp["w3"], lp["w2"], eps)
    return out.reshape(B, S, D)


def transformer_forward(params, cfg, tokens, start_pos):
    B, S = tokens.shape
    D = cfg["dim"]
    V = cfg["vocab_size"]

    h = jnp.take(params["tok_emb"], tokens, axis=0)          # (B, S, D) f32
    cos = params["rope_cos"][start_pos:start_pos + S]
    sin = params["rope_sin"][start_pos:start_pos + S]

    for lp in params["layers"]:
        h = transformer_block(lp, cfg, h, start_pos, cos, sin)

    hf = h.reshape(B * S, D)
    # Fused final norm + vocab projection, tiled over the vocab axis.
    logits = norm_matmul(hf, params["norm_w"], params["out_w"], cfg["norm_eps"],
                         tn=512)
    return logits.reshape(B, S, V).astype(jnp.float32)


def init_params(key, cfg):
    D = cfg["dim"]
    H = cfg["n_heads"]
    Hkv = cfg["n_kv_heads"]
    hd = D // H
    V = cfg["vocab_size"]
    nl = cfg["n_layers"]
    m = cfg["multiple_of"]
    hidden = int(2 * (4 * D) / 3)
    hidden = m * ((hidden + m - 1) // m)

    def nw(k, shape, scale=0.02, dtype=jnp.bfloat16):
        return (scale * jax.random.normal(k, shape, dtype=jnp.float32)).astype(dtype)

    keys = jax.random.split(key, 2 + nl)
    cos, sin = precompute_rope(hd, 2 * cfg["max_seq_len"], cfg["rope_theta"])
    params = {
        "tok_emb": nw(keys[0], (V, D), 1.0, jnp.float32),
        "norm_w": jnp.ones((D,), jnp.float32),
        "out_w": nw(keys[1], (D, V)),
        "rope_cos": cos,
        "rope_sin": sin,
        "layers": [],
    }
    for i in range(nl):
        lk = jax.random.split(keys[2 + i], 5)
        params["layers"].append({
            "attn_norm_w": jnp.ones((D,), jnp.float32),
            "ffn_norm_w": jnp.ones((D,), jnp.float32),
            "wqkv": nw(lk[0], (D, (H + 2 * Hkv) * hd)),      # [wq | wk | wv]
            "wo": nw(lk[1], (H * hd, D)),
            "w1": nw(lk[2], (D, hidden)),
            "w3": nw(lk[3], (D, hidden)),
            "w2": nw(lk[4], (hidden, D)),
        })
    return params


# -------------------------- pure-JAX reference check ------------------------- #

def _reference_forward(params, cfg, tokens, start_pos):
    B, S = tokens.shape
    D = cfg["dim"]
    H = cfg["n_heads"]
    Hkv = cfg["n_kv_heads"]
    hd = D // H
    n_rep = H // Hkv
    eps = cfg["norm_eps"]
    cos = params["rope_cos"][start_pos:start_pos + S]
    sin = params["rope_sin"][start_pos:start_pos + S]

    def rms(x, w):
        x = x.astype(jnp.float32)
        return x * lax.rsqrt(jnp.mean(x * x, -1, keepdims=True) + eps) * w

    h = jnp.take(params["tok_emb"], tokens, axis=0)
    Skv = start_pos + S
    mask = jnp.tril(jnp.ones((S, Skv), bool), k=start_pos)
    for lp in params["layers"]:
        xn = rms(h, lp["attn_norm_w"]).reshape(B * S, D)
        qkv = xn @ lp["wqkv"].astype(jnp.float32)
        q = qkv[:, :H * hd].reshape(B, S, H, hd)
        k = qkv[:, H * hd:(H + Hkv) * hd].reshape(B, S, Hkv, hd)
        v = qkv[:, (H + Hkv) * hd:].reshape(B, S, Hkv, hd)
        q = apply_rope(q, cos, sin)
        k = apply_rope(k, cos, sin)
        if start_pos > 0:
            zp = jnp.zeros((B, start_pos, Hkv, hd), k.dtype)
            k = jnp.concatenate([zp, k], 1)
            v = jnp.concatenate([zp, v], 1)
        k = jnp.repeat(k, n_rep, axis=2)
        v = jnp.repeat(v, n_rep, axis=2)
        scores = jnp.einsum("bqhd,bkhd->bhqk", q, k) / math.sqrt(hd)
        scores = jnp.where(mask[None, None], scores, -jnp.inf)
        p = jax.nn.softmax(scores, axis=-1)
        o = jnp.einsum("bhqk,bkhd->bqhd", p, v).reshape(B * S, D)
        hf = h.reshape(B * S, D) + o @ lp["wo"].astype(jnp.float32)
        xn2 = rms(hf, lp["ffn_norm_w"])
        h1 = xn2 @ lp["w1"].astype(jnp.float32)
        h3 = xn2 @ lp["w3"].astype(jnp.float32)
        hf = hf + (jax.nn.silu(h1) * h3) @ lp["w2"].astype(jnp.float32)
        h = hf.reshape(B, S, D)
    hn = rms(h.reshape(B * S, D), params["norm_w"])
    logits = hn @ params["out_w"].astype(jnp.float32)
    return logits.reshape(B, S, -1)


if __name__ == "__main__":
    cfg = dict(
        dim=512, n_layers=2, n_heads=4, n_kv_heads=2, vocab_size=256,
        multiple_of=256, norm_eps=1e-5, rope_theta=500000.0, max_seq_len=16,
    )
    key = jax.random.PRNGKey(0)
    pkey, tkey = jax.random.split(key)
    params = init_params(pkey, cfg)

    tokens = jax.random.randint(tkey, (2, 8), 0, cfg["vocab_size"], dtype=jnp.int32)
    logits = transformer_forward(params, cfg, tokens, start_pos=0)
    jax.block_until_ready(logits)

    assert logits.shape == (2, 8, cfg["vocab_size"])
    assert logits.dtype == jnp.float32
    assert bool(jnp.all(jnp.isfinite(logits)))

    ref = _reference_forward(params, cfg, tokens, start_pos=0)
    max_err = float(jnp.max(jnp.abs(logits - ref)))
    assert max_err < 8e-2, f"mismatch vs pure-JAX reference: {max_err}"
    print("KERNEL_OK")
</pallas_src>

<mosaic_0001>
module attributes {stable_mosaic.version = 11 : i64} {
  func.func @_norm_matmul_kernel(%arg0: i32, %arg1: i32, %arg2: memref<16x512xf32, #tpu.memory_space<vmem>>, %arg3: memref<1x512xf32, #tpu.memory_space<vmem>>, %arg4: memref<512x512xbf16, #tpu.memory_space<vmem>>, %arg5: memref<16x512xbf16, #tpu.memory_space<vmem>>, %arg6: memref<16x512xbf16, #tpu.memory_space<vmem>>) attributes {dimension_semantics = [#tpu.dimension_semantics<parallel>, #tpu.dimension_semantics<arbitrary>], iteration_bounds = array<i64: 1, 2>, scalar_prefetch = 0 : i64, scratch_operands = 1 : i64, tpu.core_type = #tpu.core_type<tc>, window_params = [{transform_indices = @transform_0, window_bounds = array<i64: 16, 512>}, {pipeline_mode = #tpu.pipeline_mode<synchronous>, transform_indices = @transform_1, window_bounds = array<i64: 1, 512>}, {transform_indices = @transform_2, window_bounds = array<i64: 512, 512>}, {transform_indices = @transform_3, window_bounds = array<i64: 16, 512>}]} {
    %c0_i32 = arith.constant 0 : i32
    %0 = arith.cmpi eq, %arg1, %c0_i32 : i32
    %1 = arith.extui %0 : i1 to i32
    %c0_i32_0 = arith.constant 0 : i32
    %2 = arith.cmpi ne, %1, %c0_i32_0 : i32
    scf.if %2 {
      %c0_6 = arith.constant 0 : index
      %c0_7 = arith.constant 0 : index
      %8 = vector.load %arg2[%c0_6, %c0_7] : memref<16x512xf32, #tpu.memory_space<vmem>>, vector<16x512xf32>
      %9 = arith.mulf %8, %8 : vector<16x512xf32>
      %cst_8 = arith.constant dense<0.000000e+00> : vector<16xf32>
      %10 = vector.multi_reduction <add>, %9, %cst_8 [1] : vector<16x512xf32> to vector<16xf32>
      %11 = vector.shape_cast %10 : vector<16xf32> to vector<16x1xf32>
      %cst_9 = arith.constant 5.120000e+02 : f32
      %12 = vector.broadcast %cst_9 : f32 to vector<16x1xf32>
      %13 = arith.divf %11, %12 : vector<16x1xf32>
      %cst_10 = arith.constant 9.99999974E-6 : f32
      %14 = vector.broadcast %cst_10 : f32 to vector<16x1xf32>
      %15 = arith.addf %13, %14 : vector<16x1xf32>
      %16 = math.rsqrt %15 : vector<16x1xf32>
      %17 = vector.broadcast %16 : vector<16x1xf32> to vector<16x512xf32>
      %18 = arith.mulf %8, %17 : vector<16x512xf32>
      %c0_11 = arith.constant 0 : index
      %c0_12 = arith.constant 0 : index
      %19 = vector.load %arg3[%c0_11, %c0_12] : memref<1x512xf32, #tpu.memory_space<vmem>>, vector<1x512xf32>
      %20 = vector.broadcast %19 : vector<1x512xf32> to vector<16x512xf32>
      %21 = arith.mulf %18, %20 : vector<16x512xf32>
      %22 = arith.truncf %21 : vector<16x512xf32> to vector<16x512xbf16>
      %c0_13 = arith.constant 0 : index
      %c0_14 = arith.constant 0 : index
      %23 = vector.load %arg6[%c0_13, %c0_14] : memref<16x512xbf16, #tpu.memory_space<vmem>>, vector<16x512xbf16>
      tpu.vector_store %arg6[%c0_13, %c0_14], %22 {strides = array<i32>} : memref<16x512xbf16, #tpu.memory_space<vmem>>, vector<16x512xbf16>,
    } else {
    }
    %c0 = arith.constant 0 : index
    %c0_1 = arith.constant 0 : index
    %3 = vector.load %arg6[%c0, %c0_1] : memref<16x512xbf16, #tpu.memory_space<vmem>>, vector<16x512xbf16>
    %c0_2 = arith.constant 0 : index
    %c0_3 = arith.constant 0 : index
    %4 = vector.load %arg4[%c0_2, %c0_3] : memref<512x512xbf16, #tpu.memory_space<vmem>>, vector<512x512xbf16>
    %cst = arith.constant dense<0.000000e+00> : vector<16x512xf32>
    %5 = tpu.matmul %3, %4, %cst {dimension_numbers = #tpu.dot_dimension_numbers<[1], [0], [0], [1], [0, 0, 1, 1], [], []>} : vector<16x512xbf16>, vector<512x512xbf16>, vector<16x512xf32> -> vector<16x512xf32>
    %6 = arith.truncf %5 : vector<16x512xf32> to vector<16x512xbf16>
    %c0_4 = arith.constant 0 : index
    %c0_5 = arith.constant 0 : index
    %7 = vector.load %arg5[%c0_4, %c0_5] : memref<16x512xbf16, #tpu.memory_space<vmem>>, vector<16x512xbf16>
    tpu.vector_store %arg5[%c0_4, %c0_5], %6 {strides = array<i32>} : memref<16x512xbf16, #tpu.memory_space<vmem>>, vector<16x512xbf16>,
    return
  }
  func.func @transform_0(%arg0: i32, %arg1: i32) -> (i32, i32) {
    %c0_i32 = arith.constant 0 : i32
    %c0_i32_0 = arith.constant 0 : i32
    return %arg0, %c0_i32 : i32, i32
  }
  func.func @transform_1(%arg0: i32, %arg1: i32) -> (i32, i32) {
    %c0_i32 = arith.constant 0 : i32
    %c0_i32_0 = arith.constant 0 : i32
    %c0_i32_1 = arith.constant 0 : i32
    return %c0_i32, %c0_i32_0 : i32, i32
  }
  func.func @transform_2(%arg0: i32, %arg1: i32) -> (i32, i32) {
    %c0_i32 = arith.constant 0 : i32
    %c0_i32_0 = arith.constant 0 : i32
    return %c0_i32, %arg1 : i32, i32
  }
  func.func @transform_3(%arg0: i32, %arg1: i32) -> (i32, i32) {
    %c0_i32 = arith.constant 0 : i32
    return %arg0, %arg1 : i32, i32
  }
}

</mosaic_0001>

<llo_original>
// kernel: tpu_custom_call.1
$region0: #{tpu_custom_call.1}
  #allocation0 [shape = 'u32[]', space=smem, size = 0x4, offset = 0x4, fixed_abs, tag = 'smem constant byte address 0x4 - core index']
  #allocation1 [shape = 'u32[144,128]{1,0:T(1,128)}', space=vmem, size = 0x12000, scoped, tag = 'internal scratch']
  #allocation2 [shape = 'bf16[16,512]{1,0:T(16,128)(2,1)}', space=vmem, size = 0x4000, scoped, tag = 'scratch operand']
  %s0 = inlined_call_operand.hbm [shape: f32[16,512], index: 0, kind: input, shape index: {}]
  %s1 = inlined_call_operand.hbm [shape: f32[1,512], index: 1, kind: input, shape index: {}]
  %s2 = inlined_call_operand.hbm [shape: bf16[512,1024], index: 2, kind: input, shape index: {}]
  %s3 = inlined_call_operand.hbm [shape: bf16[16,1024], index: 3, kind: output, shape index: {}]
  %s4 = sld [smem:[#allocation0]]
  $region61: #{tpu_custom_call.1} parent=0
    _
  %s6 = ssub.s32 1, %s4
  %s7 = scalar_select 0, %s6, %s4
  $region1: #{tpu_custom_call.1} parent=0
    #allocation3 [shape = 'u8[32768]{0}', space=vmem, size = 0x8000, scoped, tag = 'input window, operand 0, single buffered']
    #allocation4 [shape = 's32[2]{0}', space=sflag, size = 0x8, scoped, tag = 'scoped memory for tpu_custom_call.1']
    #allocation5 [shape = 's32[2]{0}', space=sflag, size = 0x8, scoped, tag = 'scoped memory for tpu_custom_call.1']
    #allocation6 [shape = 'u8[2048]{0}', space=vmem, size = 0x800, scoped, tag = 'input window, operand 1, single buffered']
    #allocation7 [shape = 's32[1]{0}', space=sflag, size = 0x4, scoped, tag = 'scoped memory for tpu_custom_call.1']
    #allocation8 [shape = 'u8[1048576]{0}', space=vmem, size = 0x100000, scoped, tag = 'input window, operand 2']
    #allocation9 [shape = 'u8[32768]{0}', space=vmem, size = 0x8000, scoped, tag = 'output window, operand 0']
    %8 = vsyncpa [#allocation4], 0
    %9 = vsyncpa [#allocation7], 0
    %10 = vsyncpa [#allocation5], 0
    %s11 = scalar_lea.sflag [#allocation5], 1
    %12 = vsyncpa %s11, 0
    loop: start=0, step=1, limit=4
    $region2: #{tpu_custom_call.1} parent=1 // loop_pre_header
      _
    $region3: #{tpu_custom_call.1} parent=1 // loop_header
      %s14 = sphi 0, %s18
      %p15 = scmp.ge.s32.totalorder %s14, 4
      %s21 = sphi 0, %s33
      %s22 = sphi 0, %s29
      %s23 = sphi 0, %s21
      %s24 = sphi 0, %s22
      %s25 = sphi 0, %s23
      %s26 = sphi 0, %s24
      %s36 = sphi 0, %s38
      %s39 = sphi 0, %s36
      %s40 = sphi 0, %s39
      %s56 = sphi 0, %s40
      %s60 = sphi 0, %s60
      %s62 = sphi 0, %s60
      %s63 = sphi 0, %s62
      %s77 = sphi 0, %s63
      %s83 = sphi 0, %s85
      %s86 = sphi 0, %s83
      %s87 = sphi 0, %s86
      %s103 = sphi 0, %s87
      %s111 = sphi 0, %s113
      %s114 = sphi 0, %s111
      %s115 = sphi 0, %s114
      %s131 = sphi 0, %s115
    $region4: #{tpu_custom_call.1} parent=1 // loop_header_branch
      %17 = sbr.rel (%p15) target = $region8
    $region5: #{tpu_custom_call.1} parent=1 // loop_body
      %s19 = ssub.s32 %s14, 1
      %s20 = ssub.s32 %s14, 2
      %s27 = sadd.s32 1, %s22
      %p28 = scmp.ge.s32.totalorder %s27, 2
      %s29 = scalar_select %p28, 0, %s27
      %s30 = sadd.s32 1, %s21
      %s31 = scalar_select %p28, %s30, %s21
      %p32 = scmp.ge.s32.totalorder %s31, 1
      %s33 = scalar_select %p32, 0, %s31
      %s34 = ssub.s32 %s21, %s33
      %p35 = scmp.eq.s32.totalorder %s34, 0
      %s37 = sadd.s32 %s36, 1
      %s38 = scalar_select %p35, %s36, %s37
      %p41 = pneg %p35
      %p42 = scmp.eq.s32.totalorder %s14, 1
      %p43 = por %p41, %p42
      %p44 = scmp.ne.s32.totalorder %s36, %s39
      %p45 = scmp.eq.s32.totalorder %s14, 0
      %p46 = por %p44, %p45
      %p47 = scmp.ne.s32.totalorder %s36, %s39
      %p48 = scmp.eq.s32.totalorder %s19, 1
      %p49 = por %p47, %p48
      %p50 = scmp.ne.s32.totalorder %s39, %s40
      %p51 = scmp.eq.s32.totalorder %s19, 0
      %p52 = por %p50, %p51
      %p53 = scmp.ne.s32.totalorder %s39, %s40
      %p54 = scmp.eq.s32.totalorder %s20, 1
      %p55 = por %p53, %p54
      %p57 = scmp.ne.s32.totalorder %s40, %s56
      %p58 = scmp.eq.s32.totalorder %s20, 0
      %p59 = por %p57, %p58
      %s61 = sadd.s32 %s60, 1
      %p64 = scmp.eq.s32.totalorder %s14, 1
      %p65 = scmp.ne.s32.totalorder %s60, %s62
      %p66 = scmp.eq.s32.totalorder %s14, 0
      %p67 = por %p65, %p66
      %p68 = scmp.ne.s32.totalorder %s60, %s62
      %p69 = scmp.eq.s32.totalorder %s19, 1
      %p70 = por %p68, %p69
      %p71 = scmp.ne.s32.totalorder %s62, %s63
      %p72 = scmp.eq.s32.totalorder %s19, 0
      %p73 = por %p71, %p72
      %p74 = scmp.ne.s32.totalorder %s62, %s63
      %p75 = scmp.eq.s32.totalorder %s20, 1
      %p76 = por %p74, %p75
      %p78 = scmp.ne.s32.totalorder %s63, %s77
      %p79 = scmp.eq.s32.totalorder %s20, 0
      %p80 = por %p78, %p79
      %s81 = ssub.s32 %s22, %s29
      %p82 = scmp.eq.s32.totalorder %s81, 0
      %s84 = sadd.s32 %s83, 1
      %s85 = scalar_select %p82, %s83, %s84
      %p88 = pneg %p82
      %p89 = scmp.eq.s32.totalorder %s14, 1
      %p90 = por %p88, %p89
      %p91 = scmp.ne.s32.totalorder %s83, %s86
      %p92 = scmp.eq.s32.totalorder %s14, 0
      %p93 = por %p91, %p92
      %p94 = scmp.ne.s32.totalorder %s83, %s86
      %p95 = scmp.eq.s32.totalorder %s19, 1
      %p96 = por %p94, %p95
      %p97 = scmp.ne.s32.totalorder %s86, %s87
      %p98 = scmp.eq.s32.totalorder %s19, 0
      %p99 = por %p97, %p98
      %p100 = scmp.ne.s32.totalorder %s86, %s87
      %p101 = scmp.eq.s32.totalorder %s20, 1
      %p102 = por %p100, %p101
      %p104 = scmp.ne.s32.totalorder %s87, %s103
      %p105 = scmp.eq.s32.totalorder %s20, 0
      %p106 = por %p104, %p105
      %s107 = ssub.s32 %s21, %s33
      %s108 = ssub.s32 %s22, %s29
      %s109 = sor.u32 %s107, %s108
      %p110 = scmp.eq.s32.totalorder %s109, 0
      %s112 = sadd.s32 %s111, 1
      %s113 = scalar_select %p110, %s111, %s112
      %p116 = pneg %p110
      %p117 = scmp.eq.s32.totalorder %s14, 1
      %p118 = por %p116, %p117
      %p119 = scmp.ne.s32.totalorder %s111, %s114
      %p120 = scmp.eq.s32.totalorder %s14, 0
      %p121 = por %p119, %p120
      %p122 = scmp.ne.s32.totalorder %s111, %s114
      %p123 = scmp.eq.s32.totalorder %s19, 1
      %p124 = por %p122, %p123
      %p125 = scmp.ne.s32.totalorder %s114, %s115
      %p126 = scmp.eq.s32.totalorder %s19, 0
      %p127 = por %p125, %p126
      %p128 = scmp.ne.s32.totalorder %s114, %s115
      %p129 = scmp.eq.s32.totalorder %s20, 1
      %p130 = por %p128, %p129
      %p132 = scmp.ne.s32.totalorder %s115, %s131
      %p133 = scmp.eq.s32.totalorder %s20, 0
      %p134 = por %p132, %p133
      %p135 = scmp.le.s32.totalorder 1, %s14
      %p136 = scmp.lt.s32.totalorder %s14, 3
      %p137 = pnand %p135, %p136
      %p138 = pneg %p137
      // Predicated region
      $region9: #{tpu_custom_call.1} parent=5 // pred_check
        _
      $region10: #{tpu_custom_call.1} parent=5 // pred_check_branch
        %140 = sbr.rel (%p137) target = $region12
      $region11: #{tpu_custom_call.1} parent=5 // pred_region
        %s141 = ssub.s32 %s14, 1
        // Predicated region
        $region13: #{tpu_custom_call.1} parent=11 // pred_check
          %p142 = pneg %p52
        $region14: #{tpu_custom_call.1} parent=11 // pred_check_branch
          %144 = sbr.rel (%p142) target = $region16
        $region15: #{tpu_custom_call.1} parent=11 // pred_region
          %s145 = smul.u32 2, %s23
          %s147 = ssub.s32 1024, 1024
          %148 = vsyncadd [#allocation4], %s147
          %s149 = smul.addr %s145, 4
          %s150 = smul.addr %s149, 128
          %s151 = scalar_lea.hbm %s0, %s150
          %s152 = sshll.u32 [#allocation3], 4
          %s153 = int_to_ptr.vmem [resolvable:$true] %s152
          %158 = dma.hbm_to_vmem [thread:$0]  %s151, 1024, %s153, [#allocation4], 512, 512, 32
        $region16: #{tpu_custom_call.1} parent=11 // pred_fallthru
          _
        // Predicated region
        $region17: #{tpu_custom_call.1} parent=11 // pred_check
          %p159 = pneg %p73
        $region18: #{tpu_custom_call.1} parent=11 // pred_check_branch
          %161 = sbr.rel (%p159) target = $region20
        $region19: #{tpu_custom_call.1} parent=11 // pred_region
          %s163 = ssub.s32 64, 64
          %164 = vsyncadd [#allocation7], %s163
          %s166 = sshll.u32 [#allocation6], 4
          %s167 = int_to_ptr.vmem [resolvable:$true] %s166
          %169 = dma.hbm_to_vmem [thread:$0]  %s1, 64, %s167, [#allocation7]
        $region20: #{tpu_custom_call.1} parent=11 // pred_fallthru
          _
      $region12: #{tpu_custom_call.1} parent=5 // pred_fallthru
        _
      %p170 = scmp.lt.s32.totalorder %s14, 2
      // Predicated region
      $region21: #{tpu_custom_call.1} parent=5 // pred_check
        %p171 = pneg %p170
      $region22: #{tpu_custom_call.1} parent=5 // pred_check_branch
        %173 = sbr.rel (%p171) target = $region24
      $region23: #{tpu_custom_call.1} parent=5 // pred_region
        // Predicated region
        $region25: #{tpu_custom_call.1} parent=23 // pred_check
          %p174 = pneg %p93
        $region26: #{tpu_custom_call.1} parent=23 // pred_check_branch
          %176 = sbr.rel (%p174) target = $region28
        $region27: #{tpu_custom_call.1} parent=23 // pred_region
          %s177 = sand.u32 %s14, 1
          %s178 = scalar_lea.sflag [#allocation4], %s177
          %s179 = sand.u32 %s83, 1
          %s180 = smul.addr %s179, 1024
          %s181 = scalar_lea.vmem [#allocation8], %s180
          %s182 = smul.u32 4, %s22
          %s184 = ssub.s32 16384, 16384
          %185 = vsyncadd %s178, %s184
          %s186 = smul.addr %s182, 64
          %s187 = scalar_lea.hbm %s2, %s186
          %s188 = sshll.u32 %s181, 4
          %s189 = int_to_ptr.vmem [resolvable:$true] %s188
          %194 = dma.hbm_to_vmem [thread:$0]  %s187, 16384, %s189, %s178, 512, 256, 16
        $region28: #{tpu_custom_call.1} parent=23 // pred_fallthru
          _
      $region24: #{tpu_custom_call.1} parent=5 // pred_fallthru
        _
      %p195 = scmp.le.s32.totalorder 1, %s14
      %p196 = scmp.lt.s32.totalorder %s14, 3
      %p197 = pnand %p195, %p196
      %p198 = pneg %p197
      // Predicated region
      $region29: #{tpu_custom_call.1} parent=5 // pred_check
        _
      $region30: #{tpu_custom_call.1} parent=5 // pred_check_branch
        %200 = sbr.rel (%p197) target = $region32
      $region31: #{tpu_custom_call.1} parent=5 // pred_region
        %s201 = ssub.s32 %s14, 1
        // Predicated region
        $region33: #{tpu_custom_call.1} parent=31 // pred_check
          %p202 = pneg %p52
        $region34: #{tpu_custom_call.1} parent=31 // pred_check_branch
          %204 = sbr.rel (%p202) target = $region36
        $region35: #{tpu_custom_call.1} parent=31 // pred_region
          %205 = dma.done [#allocation4], 1024
        $region36: #{tpu_custom_call.1} parent=31 // pred_fallthru
          _
        // Predicated region
        $region37: #{tpu_custom_call.1} parent=31 // pred_check
          %p206 = pneg %p73
        $region38: #{tpu_custom_call.1} parent=31 // pred_check_branch
          %208 = sbr.rel (%p206) target = $region40
        $region39: #{tpu_custom_call.1} parent=31 // pred_region
          %209 = dma.done [#allocation7], 64
        $region40: #{tpu_custom_call.1} parent=31 // pred_fallthru
          _
        %s210 = sand.u32 %s19, 1
        %s211 = scalar_lea.sflag [#allocation4], %s210
        %s212 = sand.u32 %s86, 1
        %s213 = smul.addr %s212, 1024
        %s214 = scalar_lea.vmem [#allocation8], %s213
        // Predicated region
        $region41: #{tpu_custom_call.1} parent=31 // pred_check
          %p215 = pneg %p99
        $region42: #{tpu_custom_call.1} parent=31 // pred_check_branch
          %217 = sbr.rel (%p215) target = $region44
        $region43: #{tpu_custom_call.1} parent=31 // pred_region
          %218 = dma.done %s211, 16384
        $region44: #{tpu_custom_call.1} parent=31 // pred_fallthru
          _
        %p219 = pneg %p52
        %p220 = pneg %p49
        %p221 = pneg %p73
        %p222 = pneg %p70
        %s223 = sand.u32 %s19, 1
        %s224 = scalar_lea.sflag [#allocation4], %s223
        %s225 = sand.u32 %s86, 1
        %s226 = smul.addr %s225, 1024
        %s227 = scalar_lea.vmem [#allocation8], %s226
        %p228 = pneg %p99
        %p229 = pneg %p96
        %p230 = pneg %p127
        %p231 = pneg %p124
        %s232 = sand.u32 %s114, 1
        %s233 = scalar_lea.sflag [#allocation5], %s232
        %s234 = sand.u32 %s114, 1
        %s235 = smul.addr %s234, 32
        %s236 = scalar_lea.vmem [#allocation9], %s235
        %s237 = smul.u32 2, %s23
        %s238 = smul.u32 4, %s24
        %s239 = smul.u32 2, %s23
        %s240 = smul.u32 4, %s24
        %p241 = scmp.eq.s32.totalorder %s24, 0
        // Predicated region
        $region45: #{tpu_custom_call.1} parent=31 // pred_check
          %p242 = pneg %p241
        $region46: #{tpu_custom_call.1} parent=31 // pred_check_branch
          %244 = sbr.rel (%p242) target = $region48
        $region47: #{tpu_custom_call.1} parent=31 // pred_region
          %v245 = vld [vmem:[#allocation3] sm:$0xff]
          %v246 = vld [vmem:[#allocation3 + $0x8] sm:$0xff]
          %v247 = vld [vmem:[#allocation3 + $0x10] sm:$0xff]
          %v248 = vld [vmem:[#allocation3 + $0x18] sm:$0xff]
          %v249 = vld [vmem:[#allocation3 + $0x20] sm:$0xff]
          %v250 = vld [vmem:[#allocation3 + $0x28] sm:$0xff]
          %v251 = vld [vmem:[#allocation3 + $0x30] sm:$0xff]
          %v252 = vld [vmem:[#allocation3 + $0x38] sm:$0xff]
          %v253 = vmul.f32 %v245, %v245
          %v254 = vmul.f32 %v246, %v246
          %v255 = vmul.f32 %v247, %v247
          %v256 = vmul.f32 %v248, %v248
          %v257 = vmul.f32 %v249, %v249
          %v258 = vmul.f32 %v250, %v250
          %v259 = vmul.f32 %v251, %v251
          %v260 = vmul.f32 %v252, %v252
          %v261 = vadd.f32 %v253, %v254
          %v262 = vadd.f32 %v261, %v255
          %v263 = vadd.f32 %v262, %v256
          %264 = vadd.xlane.f32.xlu0 %v263
          %v265 = vpop.xlane.xlu0 %264
          %v266 = vadd.f32 %v257, %v258
          %v267 = vadd.f32 %v266, %v259
          %v268 = vadd.f32 %v267, %v260
          %269 = vadd.xlane.f32.xlu0 %v268
          %v270 = vpop.xlane.xlu0 %269
          %v271 = vrcp.pop 512.0
          %v272 = vmul.f32 %v265, %v271
          %v273 = vmul.f32 %v270, %v271
          %v274 = vadd.f32 %v272, 1e-05
          %v275 = vadd.f32 %v273, 1e-05
          %v276 = vrsqrt.pop %v274
          %v277 = vrsqrt.pop %v275
          %v278 = vmul.f32 %v245, %v276
          %v279 = vmul.f32 %v246, %v276
          %v280 = vmul.f32 %v247, %v276
          %v281 = vmul.f32 %v248, %v276
          %v282 = vmul.f32 %v249, %v277
          %v283 = vmul.f32 %v250, %v277
          %v284 = vmul.f32 %v251, %v277
          %v285 = vmul.f32 %v252, %v277
          %v286 = vld [vmem:[#allocation6] sm:$0xf]
          %v288 = vlaneseq
          %v289 = vshrl.u32 %v288, 7
          %v290 = vsub.s32 0, %v289
          %v291 = vrot.slane %v286, %v290
          %v292 = vlaneseq
          %v293 = vshrl.u32 %v292, 7
          %v294 = vsub.s32 1, %v293
          %v295 = vrot.slane %v286, %v294
          %v296 = vlaneseq
          %v297 = vshrl.u32 %v296, 7
          %v298 = vsub.s32 2, %v297
          %v299 = vrot.slane %v286, %v298
          %v300 = vlaneseq
          %v301 = vshrl.u32 %v300, 7
          %v302 = vsub.s32 3, %v301
          %v303 = vrot.slane %v286, %v302
          %v308 = vmul.f32 %v278, %v291
          %v309 = vmul.f32 %v279, %v295
          %v310 = vmul.f32 %v280, %v299
          %v311 = vmul.f32 %v281, %v303
          %v312 = vmul.f32 %v282, %v291
          %v313 = vmul.f32 %v283, %v295
          %v314 = vmul.f32 %v284, %v299
          %v315 = vmul.f32 %v285, %v303
          %v316 = vpack.c.bf16 %v312, %v308
          %v317 = vpack.c.bf16 %v313, %v309
          %v318 = vpack.c.bf16 %v314, %v310
          %v319 = vpack.c.bf16 %v315, %v311
          %320 = vst [vmem:[#allocation2] sm:$0xff] %v316
          %321 = vst [vmem:[#allocation2 + $0x8] sm:$0xff] %v317
          %322 = vst [vmem:[#allocation2 + $0x10] sm:$0xff] %v318
          %323 = vst [vmem:[#allocation2 + $0x18] sm:$0xff] %v319
        $region48: #{tpu_custom_call.1} parent=31 // pred_fallthru
          _
        %v324 = vld [vmem:[#allocation2] sm:$0xff]
        %v325 = vld [vmem:[#allocation2 + $0x8] sm:$0xff]
        %v326 = vld [vmem:[#allocation2 + $0x10] sm:$0xff]
        %v327 = vld [vmem:[#allocation2 + $0x18] sm:$0xff]
        %v328 = vld [vmem:[%s214] sm:$0xff]
        %v329 = vld [vmem:[%s214 + $0x8] sm:$0xff]
        %v330 = vld [vmem:[%s214 + $0x10] sm:$0xff]
        %v331 = vld [vmem:[%s214 + $0x18] sm:$0xff]
        %v332 = vld [vmem:[%s214 + $0x20] sm:$0xff]
        %v333 = vld [vmem:[%s214 + $0x28] sm:$0xff]
        %v334 = vld [vmem:[%s214 + $0x30] sm:$0xff]
        %v335 = vld [vmem:[%s214 + $0x38] sm:$0xff]
        %v336 = vld [vmem:[%s214 + $0x40] sm:$0xff]
        %v337 = vld [vmem:[%s214 + $0x48] sm:$0xff]
        %v338 = vld [vmem:[%s214 + $0x50] sm:$0xff]
        %v339 = vld [vmem:[%s214 + $0x58] sm:$0xff]
        %v340 = vld [vmem:[%s214 + $0x60] sm:$0xff]
        %v341 = vld [vmem:[%s214 + $0x68] sm:$0xff]
        %v342 = vld [vmem:[%s214 + $0x70] sm:$0xff]
        %v343 = vld [vmem:[%s214 + $0x78] sm:$0xff]
        %v344 = vld [vmem:[%s214 + $0x80] sm:$0xff]
        %v345 = vld [vmem:[%s214 + $0x88] sm:$0xff]
        %v346 = vld [vmem:[%s214 + $0x90] sm:$0xff]
        %v347 = vld [vmem:[%s214 + $0x98] sm:$0xff]
        %v348 = vld [vmem:[%s214 + $0xa0] sm:$0xff]
        %v349 = vld [vmem:[%s214 + $0xa8] sm:$0xff]
        %v350 = vld [vmem:[%s214 + $0xb0] sm:$0xff]
        %v351 = vld [vmem:[%s214 + $0xb8] sm:$0xff]
        %v352 = vld [vmem:[%s214 + $0xc0] sm:$0xff]
        %v353 = vld [vmem:[%s214 + $0xc8] sm:$0xff]
        %v354 = vld [vmem:[%s214 + $0xd0] sm:$0xff]
        %v355 = vld [vmem:[%s214 + $0xd8] sm:$0xff]
        %v356 = vld [vmem:[%s214 + $0xe0] sm:$0xff]
        %v357 = vld [vmem:[%s214 + $0xe8] sm:$0xff]
        %v358 = vld [vmem:[%s214 + $0xf0] sm:$0xff]
        %v359 = vld [vmem:[%s214 + $0xf8] sm:$0xff]
        %v360 = vld [vmem:[%s214 + $0x100] sm:$0xff]
        %v361 = vld [vmem:[%s214 + $0x108] sm:$0xff]
        %v362 = vld [vmem:[%s214 + $0x110] sm:$0xff]
        %v363 = vld [vmem:[%s214 + $0x118] sm:$0xff]
        %v364 = vld [vmem:[%s214 + $0x120] sm:$0xff]
        %v365 = vld [vmem:[%s214 + $0x128] sm:$0xff]
        %v366 = vld [vmem:[%s214 + $0x130] sm:$0xff]
        %v367 = vld [vmem:[%s214 + $0x138] sm:$0xff]
        %v368 = vld [vmem:[%s214 + $0x140] sm:$0xff]
        %v369 = vld [vmem:[%s214 + $0x148] sm:$0xff]
        %v370 = vld [vmem:[%s214 + $0x150] sm:$0xff]
        %v371 = vld [vmem:[%s214 + $0x158] sm:$0xff]
        %v372 = vld [vmem:[%s214 + $0x160] sm:$0xff]
        %v373 = vld [vmem:[%s214 + $0x168] sm:$0xff]
        %v374 = vld [vmem:[%s214 + $0x170] sm:$0xff]
        %v375 = vld [vmem:[%s214 + $0x178] sm:$0xff]
        %v376 = vld [vmem:[%s214 + $0x180] sm:$0xff]
        %v377 = vld [vmem:[%s214 + $0x188] sm:$0xff]
        %v378 = vld [vmem:[%s214 + $0x190] sm:$0xff]
        %v379 = vld [vmem:[%s214 + $0x198] sm:$0xff]
        %v380 = vld [vmem:[%s214 + $0x1a0] sm:$0xff]
        %v381 = vld [vmem:[%s214 + $0x1a8] sm:$0xff]
        %v382 = vld [vmem:[%s214 + $0x1b0] sm:$0xff]
        %v383 = vld [vmem:[%s214 + $0x1b8] sm:$0xff]
        %v384 = vld [vmem:[%s214 + $0x1c0] sm:$0xff]
        %v385 = vld [vmem:[%s214 + $0x1c8] sm:$0xff]
        %v386 = vld [vmem:[%s214 + $0x1d0] sm:$0xff]
        %v387 = vld [vmem:[%s214 + $0x1d8] sm:$0xff]
        %v388 = vld [vmem:[%s214 + $0x1e0] sm:$0xff]
        %v389 = vld [vmem:[%s214 + $0x1e8] sm:$0xff]
        %v390 = vld [vmem:[%s214 + $0x1f0] sm:$0xff]
        %v391 = vld [vmem:[%s214 + $0x1f8] sm:$0xff]
        %v392 = vld [vmem:[%s214 + $0x200] sm:$0xff]
        %v393 = vld [vmem:[%s214 + $0x208] sm:$0xff]
        %v394 = vld [vmem:[%s214 + $0x210] sm:$0xff]
        %v395 = vld [vmem:[%s214 + $0x218] sm:$0xff]
        %v396 = vld [vmem:[%s214 + $0x220] sm:$0xff]
        %v397 = vld [vmem:[%s214 + $0x228] sm:$0xff]
        %v398 = vld [vmem:[%s214 + $0x230] sm:$0xff]
        %v399 = vld [vmem:[%s214 + $0x238] sm:$0xff]
        %v400 = vld [vmem:[%s214 + $0x240] sm:$0xff]
        %v401 = vld [vmem:[%s214 + $0x248] sm:$0xff]
        %v402 = vld [vmem:[%s214 + $0x250] sm:$0xff]
        %v403 = vld [vmem:[%s214 + $0x258] sm:$0xff]
        %v404 = vld [vmem:[%s214 + $0x260] sm:$0xff]
        %v405 = vld [vmem:[%s214 + $0x268] sm:$0xff]
        %v406 = vld [vmem:[%s214 + $0x270] sm:$0xff]
        %v407 = vld [vmem:[%s214 + $0x278] sm:$0xff]
        %v408 = vld [vmem:[%s214 + $0x280] sm:$0xff]
        %v409 = vld [vmem:[%s214 + $0x288] sm:$0xff]
        %v410 = vld [vmem:[%s214 + $0x290] sm:$0xff]
        %v411 = vld [vmem:[%s214 + $0x298] sm:$0xff]
        %v412 = vld [vmem:[%s214 + $0x2a0] sm:$0xff]
        %v413 = vld [vmem:[%s214 + $0x2a8] sm:$0xff]
        %v414 = vld [vmem:[%s214 + $0x2b0] sm:$0xff]
        %v415 = vld [vmem:[%s214 + $0x2b8] sm:$0xff]
        %v416 = vld [vmem:[%s214 + $0x2c0] sm:$0xff]
        %v417 = vld [vmem:[%s214 + $0x2c8] sm:$0xff]
        %v418 = vld [vmem:[%s214 + $0x2d0] sm:$0xff]
        %v419 = vld [vmem:[%s214 + $0x2d8] sm:$0xff]
        %v420 = vld [vmem:[%s214 + $0x2e0] sm:$0xff]
        %v421 = vld [vmem:[%s214 + $0x2e8] sm:$0xff]
        %v422 = vld [vmem:[%s214 + $0x2f0] sm:$0xff]
        %v423 = vld [vmem:[%s214 + $0x2f8] sm:$0xff]
        %v424 = vld [vmem:[%s214 + $0x300] sm:$0xff]
        %v425 = vld [vmem:[%s214 + $0x308] sm:$0xff]
        %v426 = vld [vmem:[%s214 + $0x310] sm:$0xff]
        %v427 = vld [vmem:[%s214 + $0x318] sm:$0xff]
        %v428 = vld [vmem:[%s214 + $0x320] sm:$0xff]
        %v429 = vld [vmem:[%s214 + $0x328] sm:$0xff]
        %v430 = vld [vmem:[%s214 + $0x330] sm:$0xff]
        %v431 = vld [vmem:[%s214 + $0x338] sm:$0xff]
        %v432 = vld [vmem:[%s214 + $0x340] sm:$0xff]
        %v433 = vld [vmem:[%s214 + $0x348] sm:$0xff]
        %v434 = vld [vmem:[%s214 + $0x350] sm:$0xff]
        %v435 = vld [vmem:[%s214 + $0x358] sm:$0xff]
        %v436 = vld [vmem:[%s214 + $0x360] sm:$0xff]
        %v437 = vld [vmem:[%s214 + $0x368] sm:$0xff]
        %v438 = vld [vmem:[%s214 + $0x370] sm:$0xff]
        %v439 = vld [vmem:[%s214 + $0x378] sm:$0xff]
        %v440 = vld [vmem:[%s214 + $0x380] sm:$0xff]
        %v441 = vld [vmem:[%s214 + $0x388] sm:$0xff]
        %v442 = vld [vmem:[%s214 + $0x390] sm:$0xff]
        %v443 = vld [vmem:[%s214 + $0x398] sm:$0xff]
        %v444 = vld [vmem:[%s214 + $0x3a0] sm:$0xff]
        %v445 = vld [vmem:[%s214 + $0x3a8] sm:$0xff]
        %v446 = vld [vmem:[%s214 + $0x3b0] sm:$0xff]
        %v447 = vld [vmem:[%s214 + $0x3b8] sm:$0xff]
        %v448 = vld [vmem:[%s214 + $0x3c0] sm:$0xff]
        %v449 = vld [vmem:[%s214 + $0x3c8] sm:$0xff]
        %v450 = vld [vmem:[%s214 + $0x3d0] sm:$0xff]
        %v451 = vld [vmem:[%s214 + $0x3d8] sm:$0xff]
        %v452 = vld [vmem:[%s214 + $0x3e0] sm:$0xff]
        %v453 = vld [vmem:[%s214 + $0x3e8] sm:$0xff]
        %v454 = vld [vmem:[%s214 + $0x3f0] sm:$0xff]
        %v455 = vld [vmem:[%s214 + $0x3f8] sm:$0xff]
        %v584 = vunpack.c.l.b16 %v328
        %v585 = vunpack.c.h.b16 %v328
        %v586 = vunpack.c.l.b16 %v329
        %v587 = vunpack.c.h.b16 %v329
        %v588 = vunpack.c.l.b16 %v330
        %v589 = vunpack.c.h.b16 %v330
        %v590 = vunpack.c.l.b16 %v331
        %v591 = vunpack.c.h.b16 %v331
        %v592 = vunpack.c.l.b16 %v332
        %v593 = vunpack.c.h.b16 %v332
        %v594 = vunpack.c.l.b16 %v333
        %v595 = vunpack.c.h.b16 %v333
        %v596 = vunpack.c.l.b16 %v334
        %v597 = vunpack.c.h.b16 %v334
        %v598 = vunpack.c.l.b16 %v335
        %v599 = vunpack.c.h.b16 %v335
        %v600 = vunpack.c.l.b16 %v336
        %v601 = vunpack.c.h.b16 %v336
        %v602 = vunpack.c.l.b16 %v337
        %v603 = vunpack.c.h.b16 %v337
        %v604 = vunpack.c.l.b16 %v338
        %v605 = vunpack.c.h.b16 %v338
        %v606 = vunpack.c.l.b16 %v339
        %v607 = vunpack.c.h.b16 %v339
        %v608 = vunpack.c.l.b16 %v340
        %v609 = vunpack.c.h.b16 %v340
        %v610 = vunpack.c.l.b16 %v341
        %v611 = vunpack.c.h.b16 %v341
        %v612 = vunpack.c.l.b16 %v342
        %v613 = vunpack.c.h.b16 %v342
        %v614 = vunpack.c.l.b16 %v343
        %v615 = vunpack.c.h.b16 %v343
        %v616 = vunpack.c.l.b16 %v344
        %v617 = vunpack.c.h.b16 %v344
        %v618 = vunpack.c.l.b16 %v345
        %v619 = vunpack.c.h.b16 %v345
        %v620 = vunpack.c.l.b16 %v346
        %v621 = vunpack.c.h.b16 %v346
        %v622 = vunpack.c.l.b16 %v347
        %v623 = vunpack.c.h.b16 %v347
        %v624 = vunpack.c.l.b16 %v348
        %v625 = vunpack.c.h.b16 %v348
        %v626 = vunpack.c.l.b16 %v349
        %v627 = vunpack.c.h.b16 %v349
        %v628 = vunpack.c.l.b16 %v350
        %v629 = vunpack.c.h.b16 %v350
        %v630 = vunpack.c.l.b16 %v351
        %v631 = vunpack.c.h.b16 %v351
        %v632 = vunpack.c.l.b16 %v352
        %v633 = vunpack.c.h.b16 %v352
        %v634 = vunpack.c.l.b16 %v353
        %v635 = vunpack.c.h.b16 %v353
        %v636 = vunpack.c.l.b16 %v354
        %v637 = vunpack.c.h.b16 %v354
        %v638 = vunpack.c.l.b16 %v355
        %v639 = vunpack.c.h.b16 %v355
        %v640 = vunpack.c.l.b16 %v356
        %v641 = vunpack.c.h.b16 %v356
        %v642 = vunpack.c.l.b16 %v357
        %v643 = vunpack.c.h.b16 %v357
        %v644 = vunpack.c.l.b16 %v358
        %v645 = vunpack.c.h.b16 %v358
        %v646 = vunpack.c.l.b16 %v359
        %v647 = vunpack.c.h.b16 %v359
        %v648 = vunpack.c.l.b16 %v360
        %v649 = vunpack.c.h.b16 %v360
        %v650 = vunpack.c.l.b16 %v361
        %v651 = vunpack.c.h.b16 %v361
        %v652 = vunpack.c.l.b16 %v362
        %v653 = vunpack.c.h.b16 %v362
        %v654 = vunpack.c.l.b16 %v363
        %v655 = vunpack.c.h.b16 %v363
        %v656 = vunpack.c.l.b16 %v364
        %v657 = vunpack.c.h.b16 %v364
        %v658 = vunpack.c.l.b16 %v365
        %v659 = vunpack.c.h.b16 %v365
        %v660 = vunpack.c.l.b16 %v366
        %v661 = vunpack.c.h.b16 %v366
        %v662 = vunpack.c.l.b16 %v367
        %v663 = vunpack.c.h.b16 %v367
        %v664 = vunpack.c.l.b16 %v368
        %v665 = vunpack.c.h.b16 %v368
        %v666 = vunpack.c.l.b16 %v369
        %v667 = vunpack.c.h.b16 %v369
        %v668 = vunpack.c.l.b16 %v370
        %v669 = vunpack.c.h.b16 %v370
        %v670 = vunpack.c.l.b16 %v371
        %v671 = vunpack.c.h.b16 %v371
        %v672 = vunpack.c.l.b16 %v372
        %v673 = vunpack.c.h.b16 %v372
        %v674 = vunpack.c.l.b16 %v373
        %v675 = vunpack.c.h.b16 %v373
        %v676 = vunpack.c.l.b16 %v374
        %v677 = vunpack.c.h.b16 %v374
        %v678 = vunpack.c.l.b16 %v375
        %v679 = vunpack.c.h.b16 %v375
        %v680 = vunpack.c.l.b16 %v376
        %v681 = vunpack.c.h.b16 %v376
        %v682 = vunpack.c.l.b16 %v377
        %v683 = vunpack.c.h.b16 %v377
        %v684 = vunpack.c.l.b16 %v378
        %v685 = vunpack.c.h.b16 %v378
        %v686 = vunpack.c.l.b16 %v379
        %v687 = vunpack.c.h.b16 %v379
        %v688 = vunpack.c.l.b16 %v380
        %v689 = vunpack.c.h.b16 %v380
        %v690 = vunpack.c.l.b16 %v381
        %v691 = vunpack.c.h.b16 %v381
        %v692 = vunpack.c.l.b16 %v382
        %v693 = vunpack.c.h.b16 %v382
        %v694 = vunpack.c.l.b16 %v383
        %v695 = vunpack.c.h.b16 %v383
        %v696 = vunpack.c.l.b16 %v384
        %v697 = vunpack.c.h.b16 %v384
        %v698 = vunpack.c.l.b16 %v385
        %v699 = vunpack.c.h.b16 %v385
        %v700 = vunpack.c.l.b16 %v386
        %v701 = vunpack.c.h.b16 %v386
        %v702 = vunpack.c.l.b16 %v387
        %v703 = vunpack.c.h.b16 %v387
        %v704 = vunpack.c.l.b16 %v388
        %v705 = vunpack.c.h.b16 %v388
        %v706 = vunpack.c.l.b16 %v389
        %v707 = vunpack.c.h.b16 %v389
        %v708 = vunpack.c.l.b16 %v390
        %v709 = vunpack.c.h.b16 %v390
        %v710 = vunpack.c.l.b16 %v391
        %v711 = vunpack.c.h.b16 %v391
        %v712 = vunpack.c.l.b16 %v392
        %v713 = vunpack.c.h.b16 %v392
        %v714 = vunpack.c.l.b16 %v393
        %v715 = vunpack.c.h.b16 %v393
        %v716 = vunpack.c.l.b16 %v394
        %v717 = vunpack.c.h.b16 %v394
        %v718 = vunpack.c.l.b16 %v395
        %v719 = vunpack.c.h.b16 %v395
        %v720 = vunpack.c.l.b16 %v396
        %v721 = vunpack.c.h.b16 %v396
        %v722 = vunpack.c.l.b16 %v397
        %v723 = vunpack.c.h.b16 %v397
        %v724 = vunpack.c.l.b16 %v398
        %v725 = vunpack.c.h.b16 %v398
        %v726 = vunpack.c.l.b16 %v399
        %v727 = vunpack.c.h.b16 %v399
        %v728 = vunpack.c.l.b16 %v400
        %v729 = vunpack.c.h.b16 %v400
        %v730 = vunpack.c.l.b16 %v401
        %v731 = vunpack.c.h.b16 %v401
        %v732 = vunpack.c.l.b16 %v402
        %v733 = vunpack.c.h.b16 %v402
        %v734 = vunpack.c.l.b16 %v403
        %v735 = vunpack.c.h.b16 %v403
        %v736 = vunpack.c.l.b16 %v404
        %v737 = vunpack.c.h.b16 %v404
        %v738 = vunpack.c.l.b16 %v405
        %v739 = vunpack.c.h.b16 %v405
        %v740 = vunpack.c.l.b16 %v406
        %v741 = vunpack.c.h.b16 %v406
        %v742 = vunpack.c.l.b16 %v407
        %v743 = vunpack.c.h.b16 %v407
        %v744 = vunpack.c.l.b16 %v408
        %v745 = vunpack.c.h.b16 %v408
        %v746 = vunpack.c.l.b16 %v409
        %v747 = vunpack.c.h.b16 %v409
        %v748 = vunpack.c.l.b16 %v410
        %v749 = vunpack.c.h.b16 %v410
        %v750 = vunpack.c.l.b16 %v411
        %v751 = vunpack.c.h.b16 %v411
        %v752 = vunpack.c.l.b16 %v412
        %v753 = vunpack.c.h.b16 %v412
        %v754 = vunpack.c.l.b16 %v413
        %v755 = vunpack.c.h.b16 %v413
        %v756 = vunpack.c.l.b16 %v414
        %v757 = vunpack.c.h.b16 %v414
        %v758 = vunpack.c.l.b16 %v415
        %v759 = vunpack.c.h.b16 %v415
        %v760 = vunpack.c.l.b16 %v416
        %v761 = vunpack.c.h.b16 %v416
        %v762 = vunpack.c.l.b16 %v417
        %v763 = vunpack.c.h.b16 %v417
        %v764 = vunpack.c.l.b16 %v418
        %v765 = vunpack.c.h.b16 %v418
        %v766 = vunpack.c.l.b16 %v419
        %v767 = vunpack.c.h.b16 %v419
        %v768 = vunpack.c.l.b16 %v420
        %v769 = vunpack.c.h.b16 %v420
        %v770 = vunpack.c.l.b16 %v421
        %v771 = vunpack.c.h.b16 %v421
        %v772 = vunpack.c.l.b16 %v422
        %v773 = vunpack.c.h.b16 %v422
        %v774 = vunpack.c.l.b16 %v423
        %v775 = vunpack.c.h.b16 %v423
        %v776 = vunpack.c.l.b16 %v424
        %v777 = vunpack.c.h.b16 %v424
        %v778 = vunpack.c.l.b16 %v425
        %v779 = vunpack.c.h.b16 %v425
        %v780 = vunpack.c.l.b16 %v426
        %v781 = vunpack.c.h.b16 %v426
        %v782 = vunpack.c.l.b16 %v427
        %v783 = vunpack.c.h.b16 %v427
        %v784 = vunpack.c.l.b16 %v428
        %v785 = vunpack.c.h.b16 %v428
        %v786 = vunpack.c.l.b16 %v429
        %v787 = vunpack.c.h.b16 %v429
        %v788 = vunpack.c.l.b16 %v430
        %v789 = vunpack.c.h.b16 %v430
        %v790 = vunpack.c.l.b16 %v431
        %v791 = vunpack.c.h.b16 %v431
        %v792 = vunpack.c.l.b16 %v432
        %v793 = vunpack.c.h.b16 %v432
        %v794 = vunpack.c.l.b16 %v433
        %v795 = vunpack.c.h.b16 %v433
        %v796 = vunpack.c.l.b16 %v434
        %v797 = vunpack.c.h.b16 %v434
        %v798 = vunpack.c.l.b16 %v435
        %v799 = vunpack.c.h.b16 %v435
        %v800 = vunpack.c.l.b16 %v436
        %v801 = vunpack.c.h.b16 %v436
        %v802 = vunpack.c.l.b16 %v437
        %v803 = vunpack.c.h.b16 %v437
        %v804 = vunpack.c.l.b16 %v438
        %v805 = vunpack.c.h.b16 %v438
        %v806 = vunpack.c.l.b16 %v439
        %v807 = vunpack.c.h.b16 %v439
        %v808 = vunpack.c.l.b16 %v440
        %v809 = vunpack.c.h.b16 %v440
        %v810 = vunpack.c.l.b16 %v441
        %v811 = vunpack.c.h.b16 %v441
        %v812 = vunpack.c.l.b16 %v442
        %v813 = vunpack.c.h.b16 %v442
        %v814 = vunpack.c.l.b16 %v443
        %v815 = vunpack.c.h.b16 %v443
        %v816 = vunpack.c.l.b16 %v444
        %v817 = vunpack.c.h.b16 %v444
        %v818 = vunpack.c.l.b16 %v445
        %v819 = vunpack.c.h.b16 %v445
        %v820 = vunpack.c.l.b16 %v446
        %v821 = vunpack.c.h.b16 %v446
        %v822 = vunpack.c.l.b16 %v447
        %v823 = vunpack.c.h.b16 %v447
        %v824 = vunpack.c.l.b16 %v448
        %v825 = vunpack.c.h.b16 %v448
        %v826 = vunpack.c.l.b16 %v449
        %v827 = vunpack.c.h.b16 %v449
        %v828 = vunpack.c.l.b16 %v450
        %v829 = vunpack.c.h.b16 %v450
        %v830 = vunpack.c.l.b16 %v451
        %v831 = vunpack.c.h.b16 %v451
        %v832 = vunpack.c.l.b16 %v452
        %v833 = vunpack.c.h.b16 %v452
        %v834 = vunpack.c.l.b16 %v453
        %v835 = vunpack.c.h.b16 %v453
        %v836 = vunpack.c.l.b16 %v454
        %v837 = vunpack.c.h.b16 %v454
        %v838 = vunpack.c.l.b16 %v455
        %v839 = vunpack.c.h.b16 %v455
        %v840 = vpack.c.b16 %v588, %v584
        %v841 = vpack.c.b16 %v589, %v585
        %v842 = vpack.c.b16 %v590, %v586
        %v843 = vpack.c.b16 %v591, %v587
        %v844 = vpack.c.b16 %v596, %v592
        %v845 = vpack.c.b16 %v597, %v593
        %v846 = vpack.c.b16 %v598, %v594
        %v847 = vpack.c.b16 %v599, %v595
        %v848 = vpack.c.b16 %v604, %v600
        %v849 = vpack.c.b16 %v605, %v601
        %v850 = vpack.c.b16 %v606, %v602
        %v851 = vpack.c.b16 %v607, %v603
        %v852 = vpack.c.b16 %v612, %v608
        %v853 = vpack.c.b16 %v613, %v609
        %v854 = vpack.c.b16 %v614, %v610
        %v855 = vpack.c.b16 %v615, %v611
        %v856 = vpack.c.b16 %v620, %v616
        %v857 = vpack.c.b16 %v621, %v617
        %v858 = vpack.c.b16 %v622, %v618
        %v859 = vpack.c.b16 %v623, %v619
        %v860 = vpack.c.b16 %v628, %v624
        %v861 = vpack.c.b16 %v629, %v625
        %v862 = vpack.c.b16 %v630, %v626
        %v863 = vpack.c.b16 %v631, %v627
        %v864 = vpack.c.b16 %v636, %v632
        %v865 = vpack.c.b16 %v637, %v633
        %v866 = vpack.c.b16 %v638, %v634
        %v867 = vpack.c.b16 %v639, %v635
        %v868 = vpack.c.b16 %v644, %v640
        %v869 = vpack.c.b16 %v645, %v641
        %v870 = vpack.c.b16 %v646, %v642
        %v871 = vpack.c.b16 %v647, %v643
        %v872 = vpack.c.b16 %v652, %v648
        %v873 = vpack.c.b16 %v653, %v649
        %v874 = vpack.c.b16 %v654, %v650
        %v875 = vpack.c.b16 %v655, %v651
        %v876 = vpack.c.b16 %v660, %v656
        %v877 = vpack.c.b16 %v661, %v657
        %v878 = vpack.c.b16 %v662, %v658
        %v879 = vpack.c.b16 %v663, %v659
        %v880 = vpack.c.b16 %v668, %v664
        %v881 = vpack.c.b16 %v669, %v665
        %v882 = vpack.c.b16 %v670, %v666
        %v883 = vpack.c.b16 %v671, %v667
        %v884 = vpack.c.b16 %v676, %v672
        %v885 = vpack.c.b16 %v677, %v673
        %v886 = vpack.c.b16 %v678, %v674
        %v887 = vpack.c.b16 %v679, %v675
        %v888 = vpack.c.b16 %v684, %v680
        %v889 = vpack.c.b16 %v685, %v681
        %v890 = vpack.c.b16 %v686, %v682
        %v891 = vpack.c.b16 %v687, %v683
        %v892 = vpack.c.b16 %v692, %v688
        %v893 = vpack.c.b16 %v693, %v689
        %v894 = vpack.c.b16 %v694, %v690
        %v895 = vpack.c.b16 %v695, %v691
        %v896 = vpack.c.b16 %v700, %v696
        %v897 = vpack.c.b16 %v701, %v697
        %v898 = vpack.c.b16 %v702, %v698
        %v899 = vpack.c.b16 %v703, %v699
        %v900 = vpack.c.b16 %v708, %v704
        %v901 = vpack.c.b16 %v709, %v705
        %v902 = vpack.c.b16 %v710, %v706
        %v903 = vpack.c.b16 %v711, %v707
        %v904 = vpack.c.b16 %v716, %v712
        %v905 = vpack.c.b16 %v717, %v713
        %v906 = vpack.c.b16 %v718, %v714
        %v907 = vpack.c.b16 %v719, %v715
        %v908 = vpack.c.b16 %v724, %v720
        %v909 = vpack.c.b16 %v725, %v721
        %v910 = vpack.c.b16 %v726, %v722
        %v911 = vpack.c.b16 %v727, %v723
        %v912 = vpack.c.b16 %v732, %v728
        %v913 = vpack.c.b16 %v733, %v729
        %v914 = vpack.c.b16 %v734, %v730
        %v915 = vpack.c.b16 %v735, %v731
        %v916 = vpack.c.b16 %v740, %v736
        %v917 = vpack.c.b16 %v741, %v737
        %v918 = vpack.c.b16 %v742, %v738
        %v919 = vpack.c.b16 %v743, %v739
        %v920 = vpack.c.b16 %v748, %v744
        %v921 = vpack.c.b16 %v749, %v745
        %v922 = vpack.c.b16 %v750, %v746
        %v923 = vpack.c.b16 %v751, %v747
        %v924 = vpack.c.b16 %v756, %v752
        %v925 = vpack.c.b16 %v757, %v753
        %v926 = vpack.c.b16 %v758, %v754
        %v927 = vpack.c.b16 %v759, %v755
        %v928 = vpack.c.b16 %v764, %v760
        %v929 = vpack.c.b16 %v765, %v761
        %v930 = vpack.c.b16 %v766, %v762
        %v931 = vpack.c.b16 %v767, %v763
        %v932 = vpack.c.b16 %v772, %v768
        %v933 = vpack.c.b16 %v773, %v769
        %v934 = vpack.c.b16 %v774, %v770
        %v935 = vpack.c.b16 %v775, %v771
        %v936 = vpack.c.b16 %v780, %v776
        %v937 = vpack.c.b16 %v781, %v777
        %v938 = vpack.c.b16 %v782, %v778
        %v939 = vpack.c.b16 %v783, %v779
        %v940 = vpack.c.b16 %v788, %v784
        %v941 = vpack.c.b16 %v789, %v785
        %v942 = vpack.c.b16 %v790, %v786
        %v943 = vpack.c.b16 %v791, %v787
        %v944 = vpack.c.b16 %v796, %v792
        %v945 = vpack.c.b16 %v797, %v793
        %v946 = vpack.c.b16 %v798, %v794
        %v947 = vpack.c.b16 %v799, %v795
        %v948 = vpack.c.b16 %v804, %v800
        %v949 = vpack.c.b16 %v805, %v801
        %v950 = vpack.c.b16 %v806, %v802
        %v951 = vpack.c.b16 %v807, %v803
        %v952 = vpack.c.b16 %v812, %v808
        %v953 = vpack.c.b16 %v813, %v809
        %v954 = vpack.c.b16 %v814, %v810
        %v955 = vpack.c.b16 %v815, %v811
        %v956 = vpack.c.b16 %v820, %v816
        %v957 = vpack.c.b16 %v821, %v817
        %v958 = vpack.c.b16 %v822, %v818
        %v959 = vpack.c.b16 %v823, %v819
        %v960 = vpack.c.b16 %v828, %v824
        %v961 = vpack.c.b16 %v829, %v825
        %v962 = vpack.c.b16 %v830, %v826
        %v963 = vpack.c.b16 %v831, %v827
        %v964 = vpack.c.b16 %v836, %v832
        %v965 = vpack.c.b16 %v837, %v833
        %v966 = vpack.c.b16 %v838, %v834
        %v967 = vpack.c.b16 %v839, %v835
        %1096 = vmatprep.subr.bf16.mxu0 %v841
        %1097 = vmatpush1.bf16.msra.mxu0 %v840
        %1098 = vmatprep.subr.bf16.mxu0 %v845
        %1099 = vmatpush1.bf16.msra.mxu0 %v844
        %1100 = vmatprep.subr.bf16.mxu0 %v849
        %1101 = vmatpush1.bf16.msra.mxu0 %v848
        %1102 = vmatprep.subr.bf16.mxu0 %v853
        %1103 = vmatpush1.bf16.msra.mxu0 %v852
        %1104 = vmatprep.subr.bf16.mxu0 %v857
        %1105 = vmatpush1.bf16.msra.mxu0 %v856
        %1106 = vmatprep.subr.bf16.mxu0 %v861
        %1107 = vmatpush1.bf16.msra.mxu0 %v860
        %1108 = vmatprep.subr.bf16.mxu0 %v865
        %1109 = vmatpush1.bf16.msra.mxu0 %v864
        %1110 = vmatprep.subr.bf16.mxu0 %v869
        %1111 = vmatpush1.bf16.msra.mxu0 %v868
        %1112 = vmatprep.subr.bf16.mxu0 %v873
        %1113 = vmatpush1.bf16.msra.mxu0 %v872
        %1114 = vmatprep.subr.bf16.mxu0 %v877
        %1115 = vmatpush1.bf16.msra.mxu0 %v876
        %1116 = vmatprep.subr.bf16.mxu0 %v881
        %1117 = vmatpush1.bf16.msra.mxu0 %v880
        %1118 = vmatprep.subr.bf16.mxu0 %v885
        %1119 = vmatpush1.bf16.msra.mxu0 %v884
        %1120 = vmatprep.subr.bf16.mxu0 %v889
        %1121 = vmatpush1.bf16.msra.mxu0 %v888
        %1122 = vmatprep.subr.bf16.mxu0 %v893
        %1123 = vmatpush1.bf16.msra.mxu0 %v892
        %1124 = vmatprep.subr.bf16.mxu0 %v897
        %1125 = vmatpush1.bf16.msra.mxu0 %v896
        %1126 = vmatprep.subr.bf16.mxu0 %v901
        %1127 = vmatpush1.bf16.msra.mxu0 %v900
        %1128 = vmatprep.mubr.bf16.mxu0 %v325
        %1129 = vmatmul.mubr.bf16.gmra.mrb[0].mxu0 %v324
        %v1130 = vpop.f32.mrb[0].mxu0
        %v1131 = vadd.f32 0.0, %v1130
        %v1132 = vpop.f32.mrb[0].mxu0
        %v1133 = vadd.f32 0.0, %v1132
        %v1134 = vpop.f32.mrb[0].mxu0
        %v1135 = vadd.f32 0.0, %v1134
        %v1136 = vpop.f32.mrb[0].mxu0
        %v1137 = vadd.f32 0.0, %v1136
        %1138 = vdwg.mxu0
        %1139 = vmatprep.subr.bf16.mxu0 %v905
        %1140 = vmatpush1.bf16.msra.mxu0 %v904
        %1141 = vmatprep.subr.bf16.mxu0 %v909
        %1142 = vmatpush1.bf16.msra.mxu0 %v908
        %1143 = vmatprep.subr.bf16.mxu0 %v913
        %1144 = vmatpush1.bf16.msra.mxu0 %v912
        %1145 = vmatprep.subr.bf16.mxu0 %v917
        %1146 = vmatpush1.bf16.msra.mxu0 %v916
        %1147 = vmatprep.subr.bf16.mxu0 %v921
        %1148 = vmatpush1.bf16.msra.mxu0 %v920
        %1149 = vmatprep.subr.bf16.mxu0 %v925
        %1150 = vmatpush1.bf16.msra.mxu0 %v924
        %1151 = vmatprep.subr.bf16.mxu0 %v929
        %1152 = vmatpush1.bf16.msra.mxu0 %v928
        %1153 = vmatprep.subr.bf16.mxu0 %v933
        %1154 = vmatpush1.bf16.msra.mxu0 %v932
        %1155 = vmatprep.subr.bf16.mxu0 %v937
        %1156 = vmatpush1.bf16.msra.mxu0 %v936
        %1157 = vmatprep.subr.bf16.mxu0 %v941
        %1158 = vmatpush1.bf16.msra.mxu0 %v940
        %1159 = vmatprep.subr.bf16.mxu0 %v945
        %1160 = vmatpush1.bf16.msra.mxu0 %v944
        %1161 = vmatprep.subr.bf16.mxu0 %v949
        %1162 = vmatpush1.bf16.msra.mxu0 %v948
        %1163 = vmatprep.subr.bf16.mxu0 %v953
        %1164 = vmatpush1.bf16.msra.mxu0 %v952
        %1165 = vmatprep.subr.bf16.mxu0 %v957
        %1166 = vmatpush1.bf16.msra.mxu0 %v956
        %1167 = vmatprep.subr.bf16.mxu0 %v961
        %1168 = vmatpush1.bf16.msra.mxu0 %v960
        %1169 = vmatprep.subr.bf16.mxu0 %v965
        %1170 = vmatpush1.bf16.msra.mxu0 %v964
        %1171 = vmatprep.mubr.bf16.mxu0 %v327
        %1172 = vmatmul.mubr.bf16.gmra.mrb[0].mxu0 %v326
        %v1173 = vpop.f32.mrb[0].mxu0
        %v1174 = vadd.f32 %v1131, %v1173
        %v1175 = vpop.f32.mrb[0].mxu0
        %v1176 = vadd.f32 %v1133, %v1175
        %v1177 = vpop.f32.mrb[0].mxu0
        %v1178 = vadd.f32 %v1135, %v1177
        %v1179 = vpop.f32.mrb[0].mxu0
        %v1180 = vadd.f32 %v1137, %v1179
        %1181 = vdwg.mxu0
        %1182 = vmatprep.subr.bf16.mxu0 %v843
        %1183 = vmatpush1.bf16.msra.mxu0 %v842
        %1184 = vmatprep.subr.bf16.mxu0 %v847
        %1185 = vmatpush1.bf16.msra.mxu0 %v846
        %1186 = vmatprep.subr.bf16.mxu0 %v851
        %1187 = vmatpush1.bf16.msra.mxu0 %v850
        %1188 = vmatprep.subr.bf16.mxu0 %v855
        %1189 = vmatpush1.bf16.msra.mxu0 %v854
        %1190 = vmatprep.subr.bf16.mxu0 %v859
        %1191 = vmatpush1.bf16.msra.mxu0 %v858
        %1192 = vmatprep.subr.bf16.mxu0 %v863
        %1193 = vmatpush1.bf16.msra.mxu0 %v862
        %1194 = vmatprep.subr.bf16.mxu0 %v867
        %1195 = vmatpush1.bf16.msra.mxu0 %v866
        %1196 = vmatprep.subr.bf16.mxu0 %v871
        %1197 = vmatpush1.bf16.msra.mxu0 %v870
        %1198 = vmatprep.subr.bf16.mxu0 %v875
        %1199 = vmatpush1.bf16.msra.mxu0 %v874
        %1200 = vmatprep.subr.bf16.mxu0 %v879
        %1201 = vmatpush1.bf16.msra.mxu0 %v878
        %1202 = vmatprep.subr.bf16.mxu0 %v883
        %1203 = vmatpush1.bf16.msra.mxu0 %v882
        %1204 = vmatprep.subr.bf16.mxu0 %v887
        %1205 = vmatpush1.bf16.msra.mxu0 %v886
        %1206 = vmatprep.subr.bf16.mxu0 %v891
        %1207 = vmatpush1.bf16.msra.mxu0 %v890
        %1208 = vmatprep.subr.bf16.mxu0 %v895
        %1209 = vmatpush1.bf16.msra.mxu0 %v894
        %1210 = vmatprep.subr.bf16.mxu0 %v899
        %1211 = vmatpush1.bf16.msra.mxu0 %v898
        %1212 = vmatprep.subr.bf16.mxu0 %v903
        %1213 = vmatpush1.bf16.msra.mxu0 %v902
        %1214 = vmatprep.mubr.bf16.mxu0 %v325
        %1215 = vmatmul.mubr.bf16.gmra.mrb[0].mxu0 %v324
        %v1216 = vpop.f32.mrb[0].mxu0
        %v1217 = vadd.f32 0.0, %v1216
        %v1218 = vpop.f32.mrb[0].mxu0
        %v1219 = vadd.f32 0.0, %v1218
        %v1220 = vpop.f32.mrb[0].mxu0
        %v1221 = vadd.f32 0.0, %v1220
        %v1222 = vpop.f32.mrb[0].mxu0
        %v1223 = vadd.f32 0.0, %v1222
        %1224 = vdwg.mxu0
        %1225 = vmatprep.subr.bf16.mxu0 %v907
        %1226 = vmatpush1.bf16.msra.mxu0 %v906
        %1227 = vmatprep.subr.bf16.mxu0 %v911
        %1228 = vmatpush1.bf16.msra.mxu0 %v910
        %1229 = vmatprep.subr.bf16.mxu0 %v915
        %1230 = vmatpush1.bf16.msra.mxu0 %v914
        %1231 = vmatprep.subr.bf16.mxu0 %v919
        %1232 = vmatpush1.bf16.msra.mxu0 %v918
        %1233 = vmatprep.subr.bf16.mxu0 %v923
        %1234 = vmatpush1.bf16.msra.mxu0 %v922
        %1235 = vmatprep.subr.bf16.mxu0 %v927
        %1236 = vmatpush1.bf16.msra.mxu0 %v926
        %1237 = vmatprep.subr.bf16.mxu0 %v931
        %1238 = vmatpush1.bf16.msra.mxu0 %v930
        %1239 = vmatprep.subr.bf16.mxu0 %v935
        %1240 = vmatpush1.bf16.msra.mxu0 %v934
        %1241 = vmatprep.subr.bf16.mxu0 %v939
        %1242 = vmatpush1.bf16.msra.mxu0 %v938
        %1243 = vmatprep.subr.bf16.mxu0 %v943
        %1244 = vmatpush1.bf16.msra.mxu0 %v942
        %1245 = vmatprep.subr.bf16.mxu0 %v947
        %1246 = vmatpush1.bf16.msra.mxu0 %v946
        %1247 = vmatprep.subr.bf16.mxu0 %v951
        %1248 = vmatpush1.bf16.msra.mxu0 %v950
        %1249 = vmatprep.subr.bf16.mxu0 %v955
        %1250 = vmatpush1.bf16.msra.mxu0 %v954
        %1251 = vmatprep.subr.bf16.mxu0 %v959
        %1252 = vmatpush1.bf16.msra.mxu0 %v958
        %1253 = vmatprep.subr.bf16.mxu0 %v963
        %1254 = vmatpush1.bf16.msra.mxu0 %v962
        %1255 = vmatprep.subr.bf16.mxu0 %v967
        %1256 = vmatpush1.bf16.msra.mxu0 %v966
        %1257 = vmatprep.mubr.bf16.mxu0 %v327
        %1258 = vmatmul.mubr.bf16.gmra.mrb[0].mxu0 %v326
        %v1259 = vpop.f32.mrb[0].mxu0
        %v1260 = vadd.f32 %v1217, %v1259
        %v1261 = vpop.f32.mrb[0].mxu0
        %v1262 = vadd.f32 %v1219, %v1261
        %v1263 = vpop.f32.mrb[0].mxu0
        %v1264 = vadd.f32 %v1221, %v1263
        %v1265 = vpop.f32.mrb[0].mxu0
        %v1266 = vadd.f32 %v1223, %v1265
        %1267 = vdwg.mxu0
        %v1268 = vpack.c.bf16 %v1178, %v1174
        %v1269 = vpack.c.bf16 %v1180, %v1176
        %v1270 = vpack.c.bf16 %v1264, %v1260
        %v1271 = vpack.c.bf16 %v1266, %v1262
        %v1276 = vunpack.c.l.b16 %v1268
        %v1277 = vunpack.c.l.b16 %v1269
        %v1278 = vunpack.c.l.b16 %v1270
        %v1279 = vunpack.c.l.b16 %v1271
        %v1280 = vunpack.c.h.b16 %v1268
        %v1281 = vunpack.c.h.b16 %v1269
        %v1282 = vunpack.c.h.b16 %v1270
        %v1283 = vunpack.c.h.b16 %v1271
        %v1284 = vpack.c.b16 %v1277, %v1276
        %v1285 = vpack.c.b16 %v1279, %v1278
        %v1286 = vpack.c.b16 %v1281, %v1280
        %v1287 = vpack.c.b16 %v1283, %v1282
        %1292 = vst [vmem:[%s236] sm:$0xff] %v1284
        %1293 = vst [vmem:[%s236 + $0x8] sm:$0xff] %v1285
        %1294 = vst [vmem:[%s236 + $0x10] sm:$0xff] %v1286
        %1295 = vst [vmem:[%s236 + $0x18] sm:$0xff] %v1287
        %s1296 = sand.u32 %s114, 1
        %s1297 = scalar_lea.sflag [#allocation5], %s1296
        %s1298 = sand.u32 %s114, 1
        %s1299 = smul.addr %s1298, 32
        %s1300 = scalar_lea.vmem [#allocation9], %s1299
        // Predicated region
        $region49: #{tpu_custom_call.1} parent=31 // pred_check
          %p1301 = pneg %p124
        $region50: #{tpu_custom_call.1} parent=31 // pred_check_branch
          %1303 = sbr.rel (%p1301) target = $region52
        $region51: #{tpu_custom_call.1} parent=31 // pred_region
          %s1304 = smul.u32 2, %s23
          %s1305 = smul.u32 4, %s24
          %s1307 = ssub.s32 512, 512
          %1308 = vsyncadd %s1297, %s1307
          %s1309 = smul.addr %s1304, 8
          %s1310 = sadd.s32 %s1305, %s1309
          %s1311 = smul.addr %s1310, 64
          %s1312 = scalar_lea.hbm %s3, %s1311
          %s1313 = sshll.u32 %s1300, 4
          %s1314 = int_to_ptr.vmem [resolvable:$true] %s1313
          %1319 = dma.vmem_to_hbm [thread:$0]  %s1314, 512, %s1312, %s1297, 256, 512, 16
        $region52: #{tpu_custom_call.1} parent=31 // pred_fallthru
          _
      $region32: #{tpu_custom_call.1} parent=5 // pred_fallthru
        _
      %p1320 = scmp.le.s32.totalorder 2, %s14
      // Predicated region
      $region53: #{tpu_custom_call.1} parent=5 // pred_check
        %p1321 = pneg %p1320
      $region54: #{tpu_custom_call.1} parent=5 // pred_check_branch
        %1323 = sbr.rel (%p1321) target = $region56
      $region55: #{tpu_custom_call.1} parent=5 // pred_region
        %s1324 = ssub.s32 %s14, 2
        // Predicated region
        $region57: #{tpu_custom_call.1} parent=55 // pred_check
          %p1325 = pneg %p130
        $region58: #{tpu_custom_call.1} parent=55 // pred_check_branch
          %1327 = sbr.rel (%p1325) target = $region60
        $region59: #{tpu_custom_call.1} parent=55 // pred_region
          %s1328 = sand.u32 %s115, 1
          %s1329 = scalar_lea.sflag [#allocation5], %s1328
          %s1330 = sand.u32 %s115, 1
          %s1331 = smul.addr %s1330, 32
          %s1332 = scalar_lea.vmem [#allocation9], %s1331
          %1333 = dma.done %s1329, 512
        $region60: #{tpu_custom_call.1} parent=55 // pred_fallthru
          _
      $region56: #{tpu_custom_call.1} parent=5 // pred_fallthru
        _
    $region6: #{tpu_custom_call.1} parent=1 // loop_footer
      %s18 = sadd.s32 1, %s14
    $region7: #{tpu_custom_call.1} parent=1 // loop_footer_branch
      %13 = sbr.rel target = $region3
    $region8: #{tpu_custom_call.1} parent=1 // loop_exit
      _
    %1334 = vsyncpa [#allocation4], 1
    %s1335 = scalar_lea.sflag [#allocation4], 1
    %1336 = vsyncpa %s1335, 1
    %1337 = vsyncpa [#allocation7], 1
    %1338 = vsyncpa [#allocation5], 1
    %s1339 = scalar_lea.sflag [#allocation5], 1
    %1340 = vsyncpa %s1339, 1

</llo_original>
